<compile_context>
chip_gen: v5e
topology: v5e:2x2
jax: 0.10.0
libtpu: 0.0.40
codegen_flags: <defaults>
</compile_context>

<pallas_src>
import math
import jax
import jax.numpy as jnp
from jax import lax
from jax.experimental import pallas as pl
from jax.experimental.pallas import tpu as pltpu


def _round_up(x: int, m: int) -> int:
    return ((x + m - 1) // m) * m


def mlp_kernel(x_ref, w_ref, b_ref, o_ref, acc_ref):
    # x_ref: (tm, tk) bf16   w_ref: (tk, tn) bf16   b_ref: (1, tn) f32
    # o_ref: (tm, tn) out    acc_ref: (tm, tn) f32 scratch (resident across k)
    k = pl.program_id(2)

    @pl.when(k == 0)
    def _():
        acc_ref[...] = jnp.zeros_like(acc_ref)

    acc_ref[...] += jnp.dot(
        x_ref[...], w_ref[...], preferred_element_type=jnp.float32
    )

    @pl.when(k == pl.num_programs(2) - 1)
    def _():
        # Epilogue once per output tile: bias + exact GELU (PyTorch nn.GELU default).
        acc = acc_ref[...] + b_ref[...]  # (1, tn) broadcasts over rows, f32
        inv_sqrt2 = 0.7071067811865476
        gelu = 0.5 * acc * (1.0 + lax.erf(acc * inv_sqrt2))
        # Dropout p=0.0 (module default) is the identity in train and eval.
        # TODO(synk): for p>0 training-mode dropout, draw a mask with
        #             pltpu.prng_seed / pltpu.prng_random_bits and scale by 1/(1-p).
        o_ref[...] = gelu.astype(o_ref.dtype)


def mlp_forward(x, w, b, *, tm=256, tn=256, tk=512,
                compute_dtype=jnp.bfloat16):
    """x: (B, K), w: (K, N), b: (N,) -> (B, N) = GELU(x @ w + b)."""
    B, K = x.shape
    K2, N = w.shape
    assert K == K2 and b.shape == (N,)
    out_dtype = x.dtype

    # --- choose lane/sublane-aligned tiles, shrink for small problems ---
    tm = _round_up(min(tm, _round_up(B, 8)), 8)
    tk = _round_up(min(tk, _round_up(K, 128)), 128)
    tn = _round_up(min(tn, _round_up(N, 128)), 128)

    # --- pad operands so every dim divides its tile (lane-dense output) ---
    Bp = _round_up(B, tm)
    Kp = _round_up(K, tk)
    Np = _round_up(N, tn)

    x_p = jnp.pad(x, ((0, Bp - B), (0, Kp - K))).astype(compute_dtype)
    w_p = jnp.pad(w, ((0, Kp - K), (0, Np - N))).astype(compute_dtype)
    b_p = jnp.pad(b, (0, Np - N)).astype(jnp.float32).reshape(1, Np)

    grid = (Bp // tm, Np // tn, Kp // tk)

    # VMEM budget: double-buffered bf16 x/w tiles + bias + out tile + f32 acc.
    itm = jnp.dtype(compute_dtype).itemsize
    vmem_need = (2 * (tm * tk + tk * tn) * itm
                 + 2 * tn * 4
                 + 2 * tm * tn * jnp.dtype(out_dtype).itemsize
                 + tm * tn * 4)
    vmem_limit = int(min(max(2 * vmem_need, 32 * 1024 * 1024),
                         48 * 1024 * 1024))  # safe on v5e/v6e/v7x

    cost = pl.CostEstimate(
        flops=2 * Bp * Kp * Np,
        transcendentals=Bp * Np,
        bytes_accessed=(x_p.size * itm + w_p.size * itm
                        + b_p.size * 4 + Bp * Np * jnp.dtype(out_dtype).itemsize),
    )

    out_p = pl.pallas_call(
        mlp_kernel,
        out_shape=jax.ShapeDtypeStruct((Bp, Np), out_dtype),
        grid_spec=pltpu.PrefetchScalarGridSpec(
            num_scalar_prefetch=0,
            grid=grid,
            in_specs=[
                pl.BlockSpec((tm, tk), lambda i, j, k: (i, k)),
                pl.BlockSpec((tk, tn), lambda i, j, k: (k, j)),
                pl.BlockSpec((1, tn), lambda i, j, k: (0, j)),
            ],
            out_specs=pl.BlockSpec((tm, tn), lambda i, j, k: (i, j)),
            scratch_shapes=[pltpu.VMEM((tm, tn), jnp.float32)],
        ),
        compiler_params=pltpu.CompilerParams(
            dimension_semantics=("parallel", "parallel", "arbitrary"),
            vmem_limit_bytes=vmem_limit,
        ),
        cost_estimate=cost,
    )(x_p, w_p, b_p)

    return out_p[:B, :N]


def reference_mlp(x, w, b, compute_dtype=jnp.bfloat16):
    # Mirror the kernel's bf16 MXU inputs with f32 accumulation/epilogue.
    xc = x.astype(compute_dtype).astype(jnp.float32)
    wc = w.astype(compute_dtype).astype(jnp.float32)
    y = xc @ wc + b.astype(jnp.float32)
    return 0.5 * y * (1.0 + lax.erf(y / math.sqrt(2.0)))


if __name__ == "__main__":
    key = jax.random.PRNGKey(0)
    kx, kw, kb = jax.random.split(key, 3)

    batch = 64
    in_features = 256
    out_features = 384

    # Deterministic parameter init (uniform, like PyTorch Linear's default range).
    bound = 1.0 / math.sqrt(in_features)
    w = jax.random.uniform(kw, (in_features, out_features),
                           minval=-bound, maxval=bound, dtype=jnp.float32)
    b = jax.random.uniform(kb, (out_features,),
                           minval=-bound, maxval=bound, dtype=jnp.float32)
    x = jax.random.normal(kx, (batch, in_features), dtype=jnp.float32)

    # Small tiles so the demo exercises a multi-step grid (i, j, k > 1 on k/j).
    out = mlp_forward(x, w, b, tm=64, tn=128, tk=128)
    out = jax.block_until_ready(out)

    ref = reference_mlp(x, w, b)
    assert out.shape == (batch, out_features)
    assert jnp.allclose(out, ref, atol=2e-2, rtol=2e-2), "mismatch vs reference"

    print("KERNEL_OK")
</pallas_src>

<mosaic_0001>
module attributes {stable_mosaic.version = 11 : i64} {
  func.func @mlp_kernel(%arg0: i32, %arg1: i32, %arg2: i32, %arg3: memref<64x128xbf16, #tpu.memory_space<vmem>>, %arg4: memref<128x128xbf16, #tpu.memory_space<vmem>>, %arg5: memref<1x128xf32, #tpu.memory_space<vmem>>, %arg6: memref<64x128xf32, #tpu.memory_space<vmem>>, %arg7: memref<64x128xf32, #tpu.memory_space<vmem>>) attributes {dimension_semantics = [#tpu.dimension_semantics<parallel>, #tpu.dimension_semantics<parallel>, #tpu.dimension_semantics<arbitrary>], iteration_bounds = array<i64: 1, 3, 2>, scalar_prefetch = 0 : i64, scratch_operands = 1 : i64, tpu.core_type = #tpu.core_type<tc>, window_params = [{transform_indices = @transform_0, window_bounds = array<i64: 64, 128>}, {transform_indices = @transform_1, window_bounds = array<i64: 128, 128>}, {transform_indices = @transform_2, window_bounds = array<i64: 1, 128>}, {transform_indices = @transform_3, window_bounds = array<i64: 64, 128>}]} {
    %c0_i32 = arith.constant 0 : i32
    %0 = arith.cmpi eq, %arg2, %c0_i32 : i32
    %1 = arith.extui %0 : i1 to i32
    %c0_i32_0 = arith.constant 0 : i32
    %2 = arith.cmpi ne, %1, %c0_i32_0 : i32
    scf.if %2 {
      %cst_9 = arith.constant 0.000000e+00 : f32
      %12 = vector.broadcast %cst_9 : f32 to vector<64x128xf32>
      %c0_10 = arith.constant 0 : index
      %c0_11 = arith.constant 0 : index
      %13 = vector.load %arg7[%c0_10, %c0_11] : memref<64x128xf32, #tpu.memory_space<vmem>>, vector<64x128xf32>
      tpu.vector_store %arg7[%c0_10, %c0_11], %12 {strides = array<i32>} : memref<64x128xf32, #tpu.memory_space<vmem>>, vector<64x128xf32>,
    } else {
    }
    %c0 = arith.constant 0 : index
    %c0_1 = arith.constant 0 : index
    %3 = vector.load %arg7[%c0, %c0_1] : memref<64x128xf32, #tpu.memory_space<vmem>>, vector<64x128xf32>
    %c0_2 = arith.constant 0 : index
    %c0_3 = arith.constant 0 : index
    %4 = vector.load %arg3[%c0_2, %c0_3] : memref<64x128xbf16, #tpu.memory_space<vmem>>, vector<64x128xbf16>
    %c0_4 = arith.constant 0 : index
    %c0_5 = arith.constant 0 : index
    %5 = vector.load %arg4[%c0_4, %c0_5] : memref<128x128xbf16, #tpu.memory_space<vmem>>, vector<128x128xbf16>
    %cst = arith.constant dense<0.000000e+00> : vector<64x128xf32>
    %6 = tpu.matmul %4, %5, %cst {dimension_numbers = #tpu.dot_dimension_numbers<[1], [0], [0], [1], [0, 0, 1, 1], [], []>} : vector<64x128xbf16>, vector<128x128xbf16>, vector<64x128xf32> -> vector<64x128xf32>
    %7 = arith.addf %3, %6 : vector<64x128xf32>
    %c0_6 = arith.constant 0 : index
    %c0_7 = arith.constant 0 : index
    %8 = vector.load %arg7[%c0_6, %c0_7] : memref<64x128xf32, #tpu.memory_space<vmem>>, vector<64x128xf32>
    tpu.vector_store %arg7[%c0_6, %c0_7], %7 {strides = array<i32>} : memref<64x128xf32, #tpu.memory_space<vmem>>, vector<64x128xf32>,
    %c1_i32 = arith.constant 1 : i32
    %9 = arith.cmpi eq, %arg2, %c1_i32 : i32
    %10 = arith.extui %9 : i1 to i32
    %c0_i32_8 = arith.constant 0 : i32
    %11 = arith.cmpi ne, %10, %c0_i32_8 : i32
    scf.if %11 {
      %c0_9 = arith.constant 0 : index
      %c0_10 = arith.constant 0 : index
      %12 = vector.load %arg7[%c0_9, %c0_10] : memref<64x128xf32, #tpu.memory_space<vmem>>, vector<64x128xf32>
      %c0_11 = arith.constant 0 : index
      %c0_12 = arith.constant 0 : index
      %13 = vector.load %arg5[%c0_11, %c0_12] : memref<1x128xf32, #tpu.memory_space<vmem>>, vector<1x128xf32>
      %14 = vector.broadcast %13 : vector<1x128xf32> to vector<64x128xf32>
      %15 = arith.addf %12, %14 : vector<64x128xf32>
      %cst_13 = arith.constant 5.000000e-01 : f32
      %16 = vector.broadcast %cst_13 : f32 to vector<64x128xf32>
      %17 = arith.mulf %16, %15 : vector<64x128xf32>
      %cst_14 = arith.constant 0.707106769 : f32
      %18 = vector.broadcast %cst_14 : f32 to vector<64x128xf32>
      %19 = arith.mulf %15, %18 : vector<64x128xf32>
      %20 = math.erf %19 : vector<64x128xf32>
      %cst_15 = arith.constant 1.000000e+00 : f32
      %21 = vector.broadcast %cst_15 : f32 to vector<64x128xf32>
      %22 = arith.addf %21, %20 : vector<64x128xf32>
      %23 = arith.mulf %17, %22 : vector<64x128xf32>
      %c0_16 = arith.constant 0 : index
      %c0_17 = arith.constant 0 : index
      %24 = vector.load %arg6[%c0_16, %c0_17] : memref<64x128xf32, #tpu.memory_space<vmem>>, vector<64x128xf32>
      tpu.vector_store %arg6[%c0_16, %c0_17], %23 {strides = array<i32>} : memref<64x128xf32, #tpu.memory_space<vmem>>, vector<64x128xf32>,
    } else {
    }
    return
  }
  func.func @transform_0(%arg0: i32, %arg1: i32, %arg2: i32) -> (i32, i32) {
    %c0_i32 = arith.constant 0 : i32
    return %arg0, %arg2 : i32, i32
  }
  func.func @transform_1(%arg0: i32, %arg1: i32, %arg2: i32) -> (i32, i32) {
    %c0_i32 = arith.constant 0 : i32
    return %arg2, %arg1 : i32, i32
  }
  func.func @transform_2(%arg0: i32, %arg1: i32, %arg2: i32) -> (i32, i32) {
    %c0_i32 = arith.constant 0 : i32
    %c0_i32_0 = arith.constant 0 : i32
    return %c0_i32, %arg1 : i32, i32
  }
  func.func @transform_3(%arg0: i32, %arg1: i32, %arg2: i32) -> (i32, i32) {
    %c0_i32 = arith.constant 0 : i32
    return %arg0, %arg1 : i32, i32
  }
}

</mosaic_0001>

<llo_original>
// kernel: tpu_custom_call.1
$region0: #{tpu_custom_call.1}
  #allocation0 [shape = 'u32[]', space=smem, size = 0x4, offset = 0x4, fixed_abs, tag = 'smem constant byte address 0x4 - core index']
  #allocation1 [shape = 'u32[72,128]{1,0:T(1,128)}', space=vmem, size = 0x9000, scoped, tag = 'internal scratch']
  #allocation2 [shape = 'f32[64,128]{1,0:T(8,128)}', space=vmem, size = 0x8000, scoped, tag = 'scratch operand']
  %s0 = inlined_call_operand.hbm [shape: bf16[64,256], index: 0, kind: input, shape index: {}]
  %s1 = inlined_call_operand.hbm [shape: bf16[256,384], index: 1, kind: input, shape index: {}]
  %s2 = inlined_call_operand.hbm [shape: f32[1,384], index: 2, kind: input, shape index: {}]
  %s3 = inlined_call_operand.hbm [shape: f32[64,384], index: 3, kind: output, shape index: {}]
  %s4 = sld [smem:[#allocation0]]
  $region65: #{tpu_custom_call.1} parent=0
    _
  %s6 = ssub.s32 1, %s4
  %s7 = scalar_select 0, %s6, %s4
  $region1: #{tpu_custom_call.1} parent=0
    #allocation3 [shape = 'u8[32768]{0}', space=vmem, size = 0x8000, scoped, tag = 'input window, operand 0']
    #allocation4 [shape = 's32[2]{0}', space=sflag, size = 0x8, scoped, tag = 'scoped memory for tpu_custom_call.1']
    #allocation5 [shape = 's32[2]{0}', space=sflag, size = 0x8, scoped, tag = 'scoped memory for tpu_custom_call.1']
    #allocation6 [shape = 'u8[65536]{0}', space=vmem, size = 0x10000, scoped, tag = 'input window, operand 1']
    #allocation7 [shape = 's32[2]{0}', space=sflag, size = 0x8, scoped, tag = 'scoped memory for tpu_custom_call.1']
    #allocation8 [shape = 'u8[1024]{0}', space=vmem, size = 0x400, scoped, tag = 'input window, operand 2']
    #allocation9 [shape = 'u8[65536]{0}', space=vmem, size = 0x10000, scoped, tag = 'output window, operand 0']
    %8 = vsyncpa [#allocation4], 0
    %s9 = scalar_lea.sflag [#allocation4], 1
    %10 = vsyncpa %s9, 0
    %11 = vsyncpa [#allocation7], 0
    %s12 = scalar_lea.sflag [#allocation7], 1
    %13 = vsyncpa %s12, 0
    %14 = vsyncpa [#allocation5], 0
    %s15 = scalar_lea.sflag [#allocation5], 1
    %16 = vsyncpa %s15, 0
    loop: start=0, step=1, limit=8
    $region2: #{tpu_custom_call.1} parent=1 // loop_pre_header
      _
    $region3: #{tpu_custom_call.1} parent=1 // loop_header
      %s18 = sphi 0, %s22
      %p19 = scmp.ge.s32.totalorder %s18, 8
      %s25 = sphi 0, %s44
      %s26 = sphi 0, %s40
      %s27 = sphi 0, %s36
      %s28 = sphi 0, %s25
      %s29 = sphi 0, %s26
      %s30 = sphi 0, %s27
      %s31 = sphi 0, %s28
      %s32 = sphi 0, %s29
      %s33 = sphi 0, %s30
      %s49 = sphi 0, %s51
      %s52 = sphi 0, %s49
      %s53 = sphi 0, %s52
      %s69 = sphi 0, %s53
      %s77 = sphi 0, %s79
      %s80 = sphi 0, %s77
      %s81 = sphi 0, %s80
      %s97 = sphi 0, %s81
      %s103 = sphi 0, %s105
      %s106 = sphi 0, %s103
      %s107 = sphi 0, %s106
      %s123 = sphi 0, %s107
      %s131 = sphi 0, %s133
      %s134 = sphi 0, %s131
      %s135 = sphi 0, %s134
      %s151 = sphi 0, %s135
    $region4: #{tpu_custom_call.1} parent=1 // loop_header_branch
      %21 = sbr.rel (%p19) target = $region8
    $region5: #{tpu_custom_call.1} parent=1 // loop_body
      %s23 = ssub.s32 %s18, 1
      %s24 = ssub.s32 %s18, 2
      %s34 = sadd.s32 1, %s27
      %p35 = scmp.ge.s32.totalorder %s34, 2
      %s36 = scalar_select %p35, 0, %s34
      %s37 = sadd.s32 1, %s26
      %s38 = scalar_select %p35, %s37, %s26
      %p39 = scmp.ge.s32.totalorder %s38, 3
      %s40 = scalar_select %p39, 0, %s38
      %s41 = sadd.s32 1, %s25
      %s42 = scalar_select %p39, %s41, %s25
      %p43 = scmp.ge.s32.totalorder %s42, 1
      %s44 = scalar_select %p43, 0, %s42
      %s45 = ssub.s32 %s25, %s44
      %s46 = ssub.s32 %s27, %s36
      %s47 = sor.u32 %s45, %s46
      %p48 = scmp.eq.s32.totalorder %s47, 0
      %s50 = sadd.s32 %s49, 1
      %s51 = scalar_select %p48, %s49, %s50
      %p54 = pneg %p48
      %p55 = scmp.eq.s32.totalorder %s18, 5
      %p56 = por %p54, %p55
      %p57 = scmp.ne.s32.totalorder %s49, %s52
      %p58 = scmp.eq.s32.totalorder %s18, 0
      %p59 = por %p57, %p58
      %p60 = scmp.ne.s32.totalorder %s49, %s52
      %p61 = scmp.eq.s32.totalorder %s23, 5
      %p62 = por %p60, %p61
      %p63 = scmp.ne.s32.totalorder %s52, %s53
      %p64 = scmp.eq.s32.totalorder %s23, 0
      %p65 = por %p63, %p64
      %p66 = scmp.ne.s32.totalorder %s52, %s53
      %p67 = scmp.eq.s32.totalorder %s24, 5
      %p68 = por %p66, %p67
      %p70 = scmp.ne.s32.totalorder %s53, %s69
      %p71 = scmp.eq.s32.totalorder %s24, 0
      %p72 = por %p70, %p71
      %s73 = ssub.s32 %s27, %s36
      %s74 = ssub.s32 %s26, %s40
      %s75 = sor.u32 %s73, %s74
      %p76 = scmp.eq.s32.totalorder %s75, 0
      %s78 = sadd.s32 %s77, 1
      %s79 = scalar_select %p76, %s77, %s78
      %p82 = pneg %p76
      %p83 = scmp.eq.s32.totalorder %s18, 5
      %p84 = por %p82, %p83
      %p85 = scmp.ne.s32.totalorder %s77, %s80
      %p86 = scmp.eq.s32.totalorder %s18, 0
      %p87 = por %p85, %p86
      %p88 = scmp.ne.s32.totalorder %s77, %s80
      %p89 = scmp.eq.s32.totalorder %s23, 5
      %p90 = por %p88, %p89
      %p91 = scmp.ne.s32.totalorder %s80, %s81
      %p92 = scmp.eq.s32.totalorder %s23, 0
      %p93 = por %p91, %p92
      %p94 = scmp.ne.s32.totalorder %s80, %s81
      %p95 = scmp.eq.s32.totalorder %s24, 5
      %p96 = por %p94, %p95
      %p98 = scmp.ne.s32.totalorder %s81, %s97
      %p99 = scmp.eq.s32.totalorder %s24, 0
      %p100 = por %p98, %p99
      %s101 = ssub.s32 %s26, %s40
      %p102 = scmp.eq.s32.totalorder %s101, 0
      %s104 = sadd.s32 %s103, 1
      %s105 = scalar_select %p102, %s103, %s104
      %p108 = pneg %p102
      %p109 = scmp.eq.s32.totalorder %s18, 5
      %p110 = por %p108, %p109
      %p111 = scmp.ne.s32.totalorder %s103, %s106
      %p112 = scmp.eq.s32.totalorder %s18, 0
      %p113 = por %p111, %p112
      %p114 = scmp.ne.s32.totalorder %s103, %s106
      %p115 = scmp.eq.s32.totalorder %s23, 5
      %p116 = por %p114, %p115
      %p117 = scmp.ne.s32.totalorder %s106, %s107
      %p118 = scmp.eq.s32.totalorder %s23, 0
      %p119 = por %p117, %p118
      %p120 = scmp.ne.s32.totalorder %s106, %s107
      %p121 = scmp.eq.s32.totalorder %s24, 5
      %p122 = por %p120, %p121
      %p124 = scmp.ne.s32.totalorder %s107, %s123
      %p125 = scmp.eq.s32.totalorder %s24, 0
      %p126 = por %p124, %p125
      %s127 = ssub.s32 %s25, %s44
      %s128 = ssub.s32 %s26, %s40
      %s129 = sor.u32 %s127, %s128
      %p130 = scmp.eq.s32.totalorder %s129, 0
      %s132 = sadd.s32 %s131, 1
      %s133 = scalar_select %p130, %s131, %s132
      %p136 = pneg %p130
      %p137 = scmp.eq.s32.totalorder %s18, 5
      %p138 = por %p136, %p137
      %p139 = scmp.ne.s32.totalorder %s131, %s134
      %p140 = scmp.eq.s32.totalorder %s18, 0
      %p141 = por %p139, %p140
      %p142 = scmp.ne.s32.totalorder %s131, %s134
      %p143 = scmp.eq.s32.totalorder %s23, 5
      %p144 = por %p142, %p143
      %p145 = scmp.ne.s32.totalorder %s134, %s135
      %p146 = scmp.eq.s32.totalorder %s23, 0
      %p147 = por %p145, %p146
      %p148 = scmp.ne.s32.totalorder %s134, %s135
      %p149 = scmp.eq.s32.totalorder %s24, 5
      %p150 = por %p148, %p149
      %p152 = scmp.ne.s32.totalorder %s135, %s151
      %p153 = scmp.eq.s32.totalorder %s24, 0
      %p154 = por %p152, %p153
      %p155 = scmp.le.s32.totalorder 1, %s18
      %p156 = scmp.lt.s32.totalorder %s18, 7
      %p157 = pnand %p155, %p156
      %p158 = pneg %p157
      // Predicated region
      $region9: #{tpu_custom_call.1} parent=5 // pred_check
        _
      $region10: #{tpu_custom_call.1} parent=5 // pred_check_branch
        %160 = sbr.rel (%p157) target = $region12
      $region11: #{tpu_custom_call.1} parent=5 // pred_region
        %s161 = ssub.s32 %s18, 1
      $region12: #{tpu_custom_call.1} parent=5 // pred_fallthru
        _
      %p162 = scmp.lt.s32.totalorder %s18, 6
      // Predicated region
      $region13: #{tpu_custom_call.1} parent=5 // pred_check
        %p163 = pneg %p162
      $region14: #{tpu_custom_call.1} parent=5 // pred_check_branch
        %165 = sbr.rel (%p163) target = $region16
      $region15: #{tpu_custom_call.1} parent=5 // pred_region
        // Predicated region
        $region17: #{tpu_custom_call.1} parent=15 // pred_check
          %p166 = pneg %p59
        $region18: #{tpu_custom_call.1} parent=15 // pred_check_branch
          %168 = sbr.rel (%p166) target = $region20
        $region19: #{tpu_custom_call.1} parent=15 // pred_region
          %s169 = sand.u32 %s49, 1
          %s170 = scalar_lea.sflag [#allocation4], %s169
          %s171 = sand.u32 %s49, 1
          %s172 = smul.addr %s171, 32
          %s173 = scalar_lea.vmem [#allocation3], %s172
          %s174 = smul.u32 8, %s25
          %176 = vsyncadd %s170, 0
          %s177 = smul.addr %s174, 2
          %s178 = sadd.s32 %s27, %s177
          %s179 = smul.addr %s178, 4
          %s180 = scalar_lea.hbm %s0, %s179
          %s181 = sshll.u32 %s180, 4
          %s182 = int_to_ptr.hbm [resolvable:$true] %s181
          %s183 = sshll.u32 %s173, 4
          %s184 = int_to_ptr.vmem [resolvable:$true] %s183
          %189 = dma.hbm_to_vmem [thread:$0]  %s182, 512, %s184, %s170, 128, 64, 4
        $region20: #{tpu_custom_call.1} parent=15 // pred_fallthru
          _
        // Predicated region
        $region21: #{tpu_custom_call.1} parent=15 // pred_check
          %p190 = pneg %p87
        $region22: #{tpu_custom_call.1} parent=15 // pred_check_branch
          %192 = sbr.rel (%p190) target = $region24
        $region23: #{tpu_custom_call.1} parent=15 // pred_region
          %s193 = sand.u32 %s18, 1
          %s194 = scalar_lea.sflag [#allocation7], %s193
          %s195 = sand.u32 %s77, 1
          %s196 = smul.addr %s195, 64
          %s197 = scalar_lea.vmem [#allocation6], %s196
          %s198 = smul.u32 16, %s27
          %200 = vsyncadd %s194, 0
          %s201 = smul.addr %s198, 3
          %s202 = sadd.s32 %s26, %s201
          %s203 = smul.addr %s202, 4
          %s204 = scalar_lea.hbm %s1, %s203
          %s205 = sshll.u32 %s204, 4
          %s206 = int_to_ptr.hbm [resolvable:$true] %s205
          %s207 = sshll.u32 %s197, 4
          %s208 = int_to_ptr.vmem [resolvable:$true] %s207
          %213 = dma.hbm_to_vmem [thread:$0]  %s206, 1024, %s208, %s194, 192, 64, 4
        $region24: #{tpu_custom_call.1} parent=15 // pred_fallthru
          _
        // Predicated region
        $region25: #{tpu_custom_call.1} parent=15 // pred_check
          %p214 = pneg %p113
        $region26: #{tpu_custom_call.1} parent=15 // pred_check_branch
          %216 = sbr.rel (%p214) target = $region28
        $region27: #{tpu_custom_call.1} parent=15 // pred_region
          %s217 = sand.u32 %s18, 1
          %s218 = scalar_lea.sflag [#allocation7], %s217
          %s219 = sand.u32 %s103, 1
          %s220 = scalar_lea.vmem [#allocation8], %s219
          %222 = vsyncadd %s218, 0
          %s223 = scalar_lea.hbm %s2, %s26
          %s225 = sshll.u32 %s223, 4
          %s226 = int_to_ptr.hbm [resolvable:$true] %s225
          %s227 = sshll.u32 %s220, 4
          %s228 = int_to_ptr.vmem [resolvable:$true] %s227
          %230 = dma.hbm_to_vmem [thread:$0]  %s226, 16, %s228, %s218
        $region28: #{tpu_custom_call.1} parent=15 // pred_fallthru
          _
      $region16: #{tpu_custom_call.1} parent=5 // pred_fallthru
        _
      %p231 = scmp.le.s32.totalorder 1, %s18
      %p232 = scmp.lt.s32.totalorder %s18, 7
      %p233 = pnand %p231, %p232
      %p234 = pneg %p233
      // Predicated region
      $region29: #{tpu_custom_call.1} parent=5 // pred_check
        _
      $region30: #{tpu_custom_call.1} parent=5 // pred_check_branch
        %236 = sbr.rel (%p233) target = $region32
      $region31: #{tpu_custom_call.1} parent=5 // pred_region
        %s237 = ssub.s32 %s18, 1
        %s238 = sand.u32 %s52, 1
        %s239 = scalar_lea.sflag [#allocation4], %s238
        %s240 = sand.u32 %s52, 1
        %s241 = smul.addr %s240, 32
        %s242 = scalar_lea.vmem [#allocation3], %s241
        // Predicated region
        $region33: #{tpu_custom_call.1} parent=31 // pred_check
          %p243 = pneg %p65
        $region34: #{tpu_custom_call.1} parent=31 // pred_check_branch
          %245 = sbr.rel (%p243) target = $region36
        $region35: #{tpu_custom_call.1} parent=31 // pred_region
          %247 = dma.done %s239, 512
        $region36: #{tpu_custom_call.1} parent=31 // pred_fallthru
          _
        %s248 = sand.u32 %s23, 1
        %s249 = scalar_lea.sflag [#allocation7], %s248
        %s250 = sand.u32 %s80, 1
        %s251 = smul.addr %s250, 64
        %s252 = scalar_lea.vmem [#allocation6], %s251
        // Predicated region
        $region37: #{tpu_custom_call.1} parent=31 // pred_check
          %p253 = pneg %p93
        $region38: #{tpu_custom_call.1} parent=31 // pred_check_branch
          %255 = sbr.rel (%p253) target = $region40
        $region39: #{tpu_custom_call.1} parent=31 // pred_region
          %257 = dma.done %s249, 1024
        $region40: #{tpu_custom_call.1} parent=31 // pred_fallthru
          _
        %s258 = sand.u32 %s23, 1
        %s259 = scalar_lea.sflag [#allocation7], %s258
        %s260 = sand.u32 %s106, 1
        %s261 = scalar_lea.vmem [#allocation8], %s260
        // Predicated region
        $region41: #{tpu_custom_call.1} parent=31 // pred_check
          %p262 = pneg %p119
        $region42: #{tpu_custom_call.1} parent=31 // pred_check_branch
          %264 = sbr.rel (%p262) target = $region44
        $region43: #{tpu_custom_call.1} parent=31 // pred_region
          %266 = dma.done %s259, 16
        $region44: #{tpu_custom_call.1} parent=31 // pred_fallthru
          _
        %s267 = sand.u32 %s52, 1
        %s268 = scalar_lea.sflag [#allocation4], %s267
        %s269 = sand.u32 %s52, 1
        %s270 = smul.addr %s269, 32
        %s271 = scalar_lea.vmem [#allocation3], %s270
        %p272 = pneg %p65
        %p273 = pneg %p62
        %s274 = sand.u32 %s23, 1
        %s275 = scalar_lea.sflag [#allocation7], %s274
        %s276 = sand.u32 %s80, 1
        %s277 = smul.addr %s276, 64
        %s278 = scalar_lea.vmem [#allocation6], %s277
        %p279 = pneg %p93
        %p280 = pneg %p90
        %s281 = sand.u32 %s23, 1
        %s282 = scalar_lea.sflag [#allocation7], %s281
        %s283 = sand.u32 %s106, 1
        %s284 = scalar_lea.vmem [#allocation8], %s283
        %p285 = pneg %p119
        %p286 = pneg %p116
        %p287 = pneg %p147
        %p288 = pneg %p144
        %s289 = sand.u32 %s134, 1
        %s290 = scalar_lea.sflag [#allocation5], %s289
        %s291 = sand.u32 %s134, 1
        %s292 = smul.addr %s291, 64
        %s293 = scalar_lea.vmem [#allocation9], %s292
        %s294 = smul.u32 8, %s28
        %s295 = smul.u32 16, %s30
        %s296 = smul.u32 8, %s28
        %p297 = scmp.eq.s32.totalorder %s30, 0
        // Predicated region
        $region45: #{tpu_custom_call.1} parent=31 // pred_check
          %p298 = pneg %p297
        $region46: #{tpu_custom_call.1} parent=31 // pred_check_branch
          %300 = sbr.rel (%p298) target = $region48
        $region47: #{tpu_custom_call.1} parent=31 // pred_region
          %301 = vst [vmem:[#allocation2] sm:$0xff] 0.0
          %302 = vst [vmem:[#allocation2 + $0x8] sm:$0xff] 0.0
          %303 = vst [vmem:[#allocation2 + $0x10] sm:$0xff] 0.0
          %304 = vst [vmem:[#allocation2 + $0x18] sm:$0xff] 0.0
          %305 = vst [vmem:[#allocation2 + $0x20] sm:$0xff] 0.0
          %306 = vst [vmem:[#allocation2 + $0x28] sm:$0xff] 0.0
          %307 = vst [vmem:[#allocation2 + $0x30] sm:$0xff] 0.0
          %308 = vst [vmem:[#allocation2 + $0x38] sm:$0xff] 0.0
        $region48: #{tpu_custom_call.1} parent=31 // pred_fallthru
          _
        %v309 = vld [vmem:[#allocation2] sm:$0xff]
        %v310 = vld [vmem:[#allocation2 + $0x8] sm:$0xff]
        %v311 = vld [vmem:[#allocation2 + $0x10] sm:$0xff]
        %v312 = vld [vmem:[#allocation2 + $0x18] sm:$0xff]
        %v313 = vld [vmem:[#allocation2 + $0x20] sm:$0xff]
        %v314 = vld [vmem:[#allocation2 + $0x28] sm:$0xff]
        %v315 = vld [vmem:[#allocation2 + $0x30] sm:$0xff]
        %v316 = vld [vmem:[#allocation2 + $0x38] sm:$0xff]
        %v317 = vld [vmem:[%s242] sm:$0xf]
        %v318 = vld [vmem:[%s242 + $0x4] sm:$0xf]
        %v319 = vld [vmem:[%s242 + $0x8] sm:$0xf]
        %v320 = vld [vmem:[%s242 + $0xc] sm:$0xf]
        %v321 = vld [vmem:[%s242 + $0x10] sm:$0xf]
        %v322 = vld [vmem:[%s242 + $0x14] sm:$0xf]
        %v323 = vld [vmem:[%s242 + $0x18] sm:$0xf]
        %v324 = vld [vmem:[%s242 + $0x1c] sm:$0xf]
        %v325 = vld [vmem:[%s252] sm:$0xf]
        %v326 = vld [vmem:[%s252 + $0x4] sm:$0xf]
        %v327 = vld [vmem:[%s252 + $0x8] sm:$0xf]
        %v328 = vld [vmem:[%s252 + $0xc] sm:$0xf]
        %v329 = vld [vmem:[%s252 + $0x10] sm:$0xf]
        %v330 = vld [vmem:[%s252 + $0x14] sm:$0xf]
        %v331 = vld [vmem:[%s252 + $0x18] sm:$0xf]
        %v332 = vld [vmem:[%s252 + $0x1c] sm:$0xf]
        %v333 = vld [vmem:[%s252 + $0x20] sm:$0xf]
        %v334 = vld [vmem:[%s252 + $0x24] sm:$0xf]
        %v335 = vld [vmem:[%s252 + $0x28] sm:$0xf]
        %v336 = vld [vmem:[%s252 + $0x2c] sm:$0xf]
        %v337 = vld [vmem:[%s252 + $0x30] sm:$0xf]
        %v338 = vld [vmem:[%s252 + $0x34] sm:$0xf]
        %v339 = vld [vmem:[%s252 + $0x38] sm:$0xf]
        %v340 = vld [vmem:[%s252 + $0x3c] sm:$0xf]
        %v349 = vunpack.c.l.b16 %v317
        %v350 = vunpack.c.l.b16 %v318
        %v351 = vunpack.c.l.b16 %v319
        %v352 = vunpack.c.l.b16 %v320
        %v353 = vunpack.c.l.b16 %v321
        %v354 = vunpack.c.l.b16 %v322
        %v355 = vunpack.c.l.b16 %v323
        %v356 = vunpack.c.l.b16 %v324
        %v357 = vpack.c.b16 %v350, %v349
        %v358 = vpack.c.b16 %v352, %v351
        %v359 = vpack.c.b16 %v354, %v353
        %v360 = vpack.c.b16 %v356, %v355
        %v381 = vunpack.c.l.b16 %v325
        %v382 = vunpack.c.l.b16 %v326
        %v383 = vunpack.c.l.b16 %v327
        %v384 = vunpack.c.l.b16 %v328
        %v385 = vunpack.c.l.b16 %v329
        %v386 = vunpack.c.l.b16 %v330
        %v387 = vunpack.c.l.b16 %v331
        %v388 = vunpack.c.l.b16 %v332
        %v389 = vunpack.c.l.b16 %v333
        %v390 = vunpack.c.l.b16 %v334
        %v391 = vunpack.c.l.b16 %v335
        %v392 = vunpack.c.l.b16 %v336
        %v393 = vunpack.c.l.b16 %v337
        %v394 = vunpack.c.l.b16 %v338
        %v395 = vunpack.c.l.b16 %v339
        %v396 = vunpack.c.l.b16 %v340
        %v397 = vpack.c.b16 %v382, %v381
        %v398 = vpack.c.b16 %v384, %v383
        %v399 = vpack.c.b16 %v386, %v385
        %v400 = vpack.c.b16 %v388, %v387
        %v401 = vpack.c.b16 %v390, %v389
        %v402 = vpack.c.b16 %v392, %v391
        %v403 = vpack.c.b16 %v394, %v393
        %v404 = vpack.c.b16 %v396, %v395
        %413 = vmatpush.bf16.msra.mxu0 %v404
        %414 = vmatpush.bf16.msra.mxu0 %v403
        %415 = vmatpush.bf16.msra.mxu0 %v402
        %416 = vmatpush.bf16.msra.mxu0 %v401
        %417 = vmatpush.bf16.msra.mxu0 %v400
        %418 = vmatpush.bf16.msra.mxu0 %v399
        %419 = vmatpush.bf16.msra.mxu0 %v398
        %420 = vmatpush.bf16.msra.mxu0 %v397
        %421 = vmatmul.bf16.gmra.mxu0 %v357
        %v422 = vpop.f32.mrf.mxu0
        %v423 = vadd.f32 0.0, %v422
        %v424 = vpop.f32.mrf.mxu0
        %v425 = vadd.f32 0.0, %v424
        %426 = vmatmul.bf16.gmra.mxu0 %v358
        %v427 = vpop.f32.mrf.mxu0
        %v428 = vadd.f32 0.0, %v427
        %v429 = vpop.f32.mrf.mxu0
        %v430 = vadd.f32 0.0, %v429
        %431 = vmatmul.bf16.gmra.mxu0 %v359
        %v432 = vpop.f32.mrf.mxu0
        %v433 = vadd.f32 0.0, %v432
        %v434 = vpop.f32.mrf.mxu0
        %v435 = vadd.f32 0.0, %v434
        %436 = vmatmul.bf16.gmra.mxu0 %v360
        %v437 = vpop.f32.mrf.mxu0
        %v438 = vadd.f32 0.0, %v437
        %v439 = vpop.f32.mrf.mxu0
        %v440 = vadd.f32 0.0, %v439
        %441 = vdwg.mxu0
        %v442 = vadd.f32 %v309, %v423
        %v443 = vadd.f32 %v310, %v425
        %v444 = vadd.f32 %v311, %v428
        %v445 = vadd.f32 %v312, %v430
        %v446 = vadd.f32 %v313, %v433
        %v447 = vadd.f32 %v314, %v435
        %v448 = vadd.f32 %v315, %v438
        %v449 = vadd.f32 %v316, %v440
        %450 = vst [vmem:[#allocation2] sm:$0xff] %v442
        %451 = vst [vmem:[#allocation2 + $0x8] sm:$0xff] %v443
        %452 = vst [vmem:[#allocation2 + $0x10] sm:$0xff] %v444
        %453 = vst [vmem:[#allocation2 + $0x18] sm:$0xff] %v445
        %454 = vst [vmem:[#allocation2 + $0x20] sm:$0xff] %v446
        %455 = vst [vmem:[#allocation2 + $0x28] sm:$0xff] %v447
        %456 = vst [vmem:[#allocation2 + $0x30] sm:$0xff] %v448
        %457 = vst [vmem:[#allocation2 + $0x38] sm:$0xff] %v449
        %p458 = scmp.eq.s32.totalorder %s30, 1
        // Predicated region
        $region49: #{tpu_custom_call.1} parent=31 // pred_check
          %p459 = pneg %p458
        $region50: #{tpu_custom_call.1} parent=31 // pred_check_branch
          %461 = sbr.rel (%p459) target = $region52
        $region51: #{tpu_custom_call.1} parent=31 // pred_region
          %v462 = vld [vmem:[#allocation2] sm:$0xff]
          %v463 = vld [vmem:[#allocation2 + $0x8] sm:$0xff]
          %v464 = vld [vmem:[#allocation2 + $0x10] sm:$0xff]
          %v465 = vld [vmem:[#allocation2 + $0x18] sm:$0xff]
          %v466 = vld [vmem:[#allocation2 + $0x20] sm:$0xff]
          %v467 = vld [vmem:[#allocation2 + $0x28] sm:$0xff]
          %v468 = vld [vmem:[#allocation2 + $0x30] sm:$0xff]
          %v469 = vld [vmem:[#allocation2 + $0x38] sm:$0xff]
          %v470 = vld [vmem:[%s261] sm:$0x1]
          %v472 = vperm.slane %v470, 0
          %v474 = vadd.f32 %v462, %v472
          %v475 = vadd.f32 %v463, %v472
          %v476 = vadd.f32 %v464, %v472
          %v477 = vadd.f32 %v465, %v472
          %v478 = vadd.f32 %v466, %v472
          %v479 = vadd.f32 %v467, %v472
          %v480 = vadd.f32 %v468, %v472
          %v481 = vadd.f32 %v469, %v472
          %v482 = vmul.f32 %v474, 0.5
          %v483 = vmul.f32 %v475, 0.5
          %v484 = vmul.f32 %v476, 0.5
          %v485 = vmul.f32 %v477, 0.5
          %v486 = vmul.f32 %v478, 0.5
          %v487 = vmul.f32 %v479, 0.5
          %v488 = vmul.f32 %v480, 0.5
          %v489 = vmul.f32 %v481, 0.5
          %v490 = vmul.f32 %v474, 0.70710677
          %v491 = vmul.f32 %v475, 0.70710677
          %v492 = vmul.f32 %v476, 0.70710677
          %v493 = vmul.f32 %v477, 0.70710677
          %v494 = vmul.f32 %v478, 0.70710677
          %v495 = vmul.f32 %v479, 0.70710677
          %v496 = vmul.f32 %v480, 0.70710677
          %v497 = vmul.f32 %v481, 0.70710677
          %v498 = vmul.f32 %v490, %v490
          %v499 = vmin.f32 16.0, %v498
          %v500 = vmul.f32 %v499, 2.1237322e-06
          %v501 = vadd.f32 %v500, 0.00028619796
          %v502 = vmul.f32 %v499, %v501
          %v503 = vadd.f32 %v502, 0.0036580483
          %v504 = vmul.f32 %v499, %v503
          %v505 = vadd.f32 %v504, 0.05243302
          %v506 = vmul.f32 %v499, %v505
          %v507 = vadd.f32 %v506, 0.18741608
          %v508 = vmul.f32 %v499, %v507
          %v509 = vadd.f32 %v508, 1.1283791
          %v510 = vmul.f32 %v490, %v509
          %v511 = vmul.f32 %v499, 3.8918573e-05
          %v512 = vadd.f32 %v511, 0.001143296
          %v513 = vmul.f32 %v499, %v512
          %v514 = vadd.f32 %v513, 0.014752088
          %v515 = vmul.f32 %v499, %v514
          %v516 = vadd.f32 %v515, 0.112945676
          %v517 = vmul.f32 %v499, %v516
          %v518 = vadd.f32 %v517, 0.4994258
          %v519 = vmul.f32 %v499, %v518
          %v520 = vadd.f32 %v519, 1.0
          %v521 = vrcp.pop %v520
          %v522 = vmul.f32 %v520, %v521
          %v523 = vsub.f32 1.0, %v522
          %v524 = vmul.f32 %v521, %v523
          %v525 = vadd.f32 %v521, %v524
          %vm526 = vweird.f32 %v520
          %vm527 = vweird.f32 %v521
          %vm528 = vmor %vm526, %vm527
          %v529 = vsel %vm528, %v521, %v525
          %v530 = vand.u32 2147483647, %v520
          %vm531 = vcmp.eq.f32.partialorder %v530, 8.507059e+37
          %v532 = vand.u32 %v520, 2147483648
          %v533 = vor.u32 1.1754944e-38, %v532
          %v534 = vsel %vm531, %v533, %v529
          %v535 = vmul.f32 %v510, %v534
          %v536 = vmin.f32 %v535, 1.0
          %v537 = vmax.f32 %v536, -1.0
          %v538 = vmul.f32 %v491, %v491
          %v539 = vmin.f32 16.0, %v538
          %v540 = vmul.f32 %v539, 2.1237322e-06
          %v541 = vadd.f32 %v540, 0.00028619796
          %v542 = vmul.f32 %v539, %v541
          %v543 = vadd.f32 %v542, 0.0036580483
          %v544 = vmul.f32 %v539, %v543
          %v545 = vadd.f32 %v544, 0.05243302
          %v546 = vmul.f32 %v539, %v545
          %v547 = vadd.f32 %v546, 0.18741608
          %v548 = vmul.f32 %v539, %v547
          %v549 = vadd.f32 %v548, 1.1283791
          %v550 = vmul.f32 %v491, %v549
          %v551 = vmul.f32 %v539, 3.8918573e-05
          %v552 = vadd.f32 %v551, 0.001143296
          %v553 = vmul.f32 %v539, %v552
          %v554 = vadd.f32 %v553, 0.014752088
          %v555 = vmul.f32 %v539, %v554
          %v556 = vadd.f32 %v555, 0.112945676
          %v557 = vmul.f32 %v539, %v556
          %v558 = vadd.f32 %v557, 0.4994258
          %v559 = vmul.f32 %v539, %v558
          %v560 = vadd.f32 %v559, 1.0
          %v561 = vrcp.pop %v560
          %v562 = vmul.f32 %v560, %v561
          %v563 = vsub.f32 1.0, %v562
          %v564 = vmul.f32 %v561, %v563
          %v565 = vadd.f32 %v561, %v564
          %vm566 = vweird.f32 %v560
          %vm567 = vweird.f32 %v561
          %vm568 = vmor %vm566, %vm567
          %v569 = vsel %vm568, %v561, %v565
          %v570 = vand.u32 2147483647, %v560
          %vm571 = vcmp.eq.f32.partialorder %v570, 8.507059e+37
          %v572 = vand.u32 %v560, 2147483648
          %v573 = vor.u32 1.1754944e-38, %v572
          %v574 = vsel %vm571, %v573, %v569
          %v575 = vmul.f32 %v550, %v574
          %v576 = vmin.f32 %v575, 1.0
          %v577 = vmax.f32 %v576, -1.0
          %v578 = vmul.f32 %v492, %v492
          %v579 = vmin.f32 16.0, %v578
          %v580 = vmul.f32 %v579, 2.1237322e-06
          %v581 = vadd.f32 %v580, 0.00028619796
          %v582 = vmul.f32 %v579, %v581
          %v583 = vadd.f32 %v582, 0.0036580483
          %v584 = vmul.f32 %v579, %v583
          %v585 = vadd.f32 %v584, 0.05243302
          %v586 = vmul.f32 %v579, %v585
          %v587 = vadd.f32 %v586, 0.18741608
          %v588 = vmul.f32 %v579, %v587
          %v589 = vadd.f32 %v588, 1.1283791
          %v590 = vmul.f32 %v492, %v589
          %v591 = vmul.f32 %v579, 3.8918573e-05
          %v592 = vadd.f32 %v591, 0.001143296
          %v593 = vmul.f32 %v579, %v592
          %v594 = vadd.f32 %v593, 0.014752088
          %v595 = vmul.f32 %v579, %v594
          %v596 = vadd.f32 %v595, 0.112945676
          %v597 = vmul.f32 %v579, %v596
          %v598 = vadd.f32 %v597, 0.4994258
          %v599 = vmul.f32 %v579, %v598
          %v600 = vadd.f32 %v599, 1.0
          %v601 = vrcp.pop %v600
          %v602 = vmul.f32 %v600, %v601
          %v603 = vsub.f32 1.0, %v602
          %v604 = vmul.f32 %v601, %v603
          %v605 = vadd.f32 %v601, %v604
          %vm606 = vweird.f32 %v600
          %vm607 = vweird.f32 %v601
          %vm608 = vmor %vm606, %vm607
          %v609 = vsel %vm608, %v601, %v605
          %v610 = vand.u32 2147483647, %v600
          %vm611 = vcmp.eq.f32.partialorder %v610, 8.507059e+37
          %v612 = vand.u32 %v600, 2147483648
          %v613 = vor.u32 1.1754944e-38, %v612
          %v614 = vsel %vm611, %v613, %v609
          %v615 = vmul.f32 %v590, %v614
          %v616 = vmin.f32 %v615, 1.0
          %v617 = vmax.f32 %v616, -1.0
          %v618 = vmul.f32 %v493, %v493
          %v619 = vmin.f32 16.0, %v618
          %v620 = vmul.f32 %v619, 2.1237322e-06
          %v621 = vadd.f32 %v620, 0.00028619796
          %v622 = vmul.f32 %v619, %v621
          %v623 = vadd.f32 %v622, 0.0036580483
          %v624 = vmul.f32 %v619, %v623
          %v625 = vadd.f32 %v624, 0.05243302
          %v626 = vmul.f32 %v619, %v625
          %v627 = vadd.f32 %v626, 0.18741608
          %v628 = vmul.f32 %v619, %v627
          %v629 = vadd.f32 %v628, 1.1283791
          %v630 = vmul.f32 %v493, %v629
          %v631 = vmul.f32 %v619, 3.8918573e-05
          %v632 = vadd.f32 %v631, 0.001143296
          %v633 = vmul.f32 %v619, %v632
          %v634 = vadd.f32 %v633, 0.014752088
          %v635 = vmul.f32 %v619, %v634
          %v636 = vadd.f32 %v635, 0.112945676
          %v637 = vmul.f32 %v619, %v636
          %v638 = vadd.f32 %v637, 0.4994258
          %v639 = vmul.f32 %v619, %v638
          %v640 = vadd.f32 %v639, 1.0
          %v641 = vrcp.pop %v640
          %v642 = vmul.f32 %v640, %v641
          %v643 = vsub.f32 1.0, %v642
          %v644 = vmul.f32 %v641, %v643
          %v645 = vadd.f32 %v641, %v644
          %vm646 = vweird.f32 %v640
          %vm647 = vweird.f32 %v641
          %vm648 = vmor %vm646, %vm647
          %v649 = vsel %vm648, %v641, %v645
          %v650 = vand.u32 2147483647, %v640
          %vm651 = vcmp.eq.f32.partialorder %v650, 8.507059e+37
          %v652 = vand.u32 %v640, 2147483648
          %v653 = vor.u32 1.1754944e-38, %v652
          %v654 = vsel %vm651, %v653, %v649
          %v655 = vmul.f32 %v630, %v654
          %v656 = vmin.f32 %v655, 1.0
          %v657 = vmax.f32 %v656, -1.0
          %v658 = vmul.f32 %v494, %v494
          %v659 = vmin.f32 16.0, %v658
          %v660 = vmul.f32 %v659, 2.1237322e-06
          %v661 = vadd.f32 %v660, 0.00028619796
          %v662 = vmul.f32 %v659, %v661
          %v663 = vadd.f32 %v662, 0.0036580483
          %v664 = vmul.f32 %v659, %v663
          %v665 = vadd.f32 %v664, 0.05243302
          %v666 = vmul.f32 %v659, %v665
          %v667 = vadd.f32 %v666, 0.18741608
          %v668 = vmul.f32 %v659, %v667
          %v669 = vadd.f32 %v668, 1.1283791
          %v670 = vmul.f32 %v494, %v669
          %v671 = vmul.f32 %v659, 3.8918573e-05
          %v672 = vadd.f32 %v671, 0.001143296
          %v673 = vmul.f32 %v659, %v672
          %v674 = vadd.f32 %v673, 0.014752088
          %v675 = vmul.f32 %v659, %v674
          %v676 = vadd.f32 %v675, 0.112945676
          %v677 = vmul.f32 %v659, %v676
          %v678 = vadd.f32 %v677, 0.4994258
          %v679 = vmul.f32 %v659, %v678
          %v680 = vadd.f32 %v679, 1.0
          %v681 = vrcp.pop %v680
          %v682 = vmul.f32 %v680, %v681
          %v683 = vsub.f32 1.0, %v682
          %v684 = vmul.f32 %v681, %v683
          %v685 = vadd.f32 %v681, %v684
          %vm686 = vweird.f32 %v680
          %vm687 = vweird.f32 %v681
          %vm688 = vmor %vm686, %vm687
          %v689 = vsel %vm688, %v681, %v685
          %v690 = vand.u32 2147483647, %v680
          %vm691 = vcmp.eq.f32.partialorder %v690, 8.507059e+37
          %v692 = vand.u32 %v680, 2147483648
          %v693 = vor.u32 1.1754944e-38, %v692
          %v694 = vsel %vm691, %v693, %v689
          %v695 = vmul.f32 %v670, %v694
          %v696 = vmin.f32 %v695, 1.0
          %v697 = vmax.f32 %v696, -1.0
          %v698 = vmul.f32 %v495, %v495
          %v699 = vmin.f32 16.0, %v698
          %v700 = vmul.f32 %v699, 2.1237322e-06
          %v701 = vadd.f32 %v700, 0.00028619796
          %v702 = vmul.f32 %v699, %v701
          %v703 = vadd.f32 %v702, 0.0036580483
          %v704 = vmul.f32 %v699, %v703
          %v705 = vadd.f32 %v704, 0.05243302
          %v706 = vmul.f32 %v699, %v705
          %v707 = vadd.f32 %v706, 0.18741608
          %v708 = vmul.f32 %v699, %v707
          %v709 = vadd.f32 %v708, 1.1283791
          %v710 = vmul.f32 %v495, %v709
          %v711 = vmul.f32 %v699, 3.8918573e-05
          %v712 = vadd.f32 %v711, 0.001143296
          %v713 = vmul.f32 %v699, %v712
          %v714 = vadd.f32 %v713, 0.014752088
          %v715 = vmul.f32 %v699, %v714
          %v716 = vadd.f32 %v715, 0.112945676
          %v717 = vmul.f32 %v699, %v716
          %v718 = vadd.f32 %v717, 0.4994258
          %v719 = vmul.f32 %v699, %v718
          %v720 = vadd.f32 %v719, 1.0
          %v721 = vrcp.pop %v720
          %v722 = vmul.f32 %v720, %v721
          %v723 = vsub.f32 1.0, %v722
          %v724 = vmul.f32 %v721, %v723
          %v725 = vadd.f32 %v721, %v724
          %vm726 = vweird.f32 %v720
          %vm727 = vweird.f32 %v721
          %vm728 = vmor %vm726, %vm727
          %v729 = vsel %vm728, %v721, %v725
          %v730 = vand.u32 2147483647, %v720
          %vm731 = vcmp.eq.f32.partialorder %v730, 8.507059e+37
          %v732 = vand.u32 %v720, 2147483648
          %v733 = vor.u32 1.1754944e-38, %v732
          %v734 = vsel %vm731, %v733, %v729
          %v735 = vmul.f32 %v710, %v734
          %v736 = vmin.f32 %v735, 1.0
          %v737 = vmax.f32 %v736, -1.0
          %v738 = vmul.f32 %v496, %v496
          %v739 = vmin.f32 16.0, %v738
          %v740 = vmul.f32 %v739, 2.1237322e-06
          %v741 = vadd.f32 %v740, 0.00028619796
          %v742 = vmul.f32 %v739, %v741
          %v743 = vadd.f32 %v742, 0.0036580483
          %v744 = vmul.f32 %v739, %v743
          %v745 = vadd.f32 %v744, 0.05243302
          %v746 = vmul.f32 %v739, %v745
          %v747 = vadd.f32 %v746, 0.18741608
          %v748 = vmul.f32 %v739, %v747
          %v749 = vadd.f32 %v748, 1.1283791
          %v750 = vmul.f32 %v496, %v749
          %v751 = vmul.f32 %v739, 3.8918573e-05
          %v752 = vadd.f32 %v751, 0.001143296
          %v753 = vmul.f32 %v739, %v752
          %v754 = vadd.f32 %v753, 0.014752088
          %v755 = vmul.f32 %v739, %v754
          %v756 = vadd.f32 %v755, 0.112945676
          %v757 = vmul.f32 %v739, %v756
          %v758 = vadd.f32 %v757, 0.4994258
          %v759 = vmul.f32 %v739, %v758
          %v760 = vadd.f32 %v759, 1.0
          %v761 = vrcp.pop %v760
          %v762 = vmul.f32 %v760, %v761
          %v763 = vsub.f32 1.0, %v762
          %v764 = vmul.f32 %v761, %v763
          %v765 = vadd.f32 %v761, %v764
          %vm766 = vweird.f32 %v760
          %vm767 = vweird.f32 %v761
          %vm768 = vmor %vm766, %vm767
          %v769 = vsel %vm768, %v761, %v765
          %v770 = vand.u32 2147483647, %v760
          %vm771 = vcmp.eq.f32.partialorder %v770, 8.507059e+37
          %v772 = vand.u32 %v760, 2147483648
          %v773 = vor.u32 1.1754944e-38, %v772
          %v774 = vsel %vm771, %v773, %v769
          %v775 = vmul.f32 %v750, %v774
          %v776 = vmin.f32 %v775, 1.0
          %v777 = vmax.f32 %v776, -1.0
          %v778 = vmul.f32 %v497, %v497
          %v779 = vmin.f32 16.0, %v778
          %v780 = vmul.f32 %v779, 2.1237322e-06
          %v781 = vadd.f32 %v780, 0.00028619796
          %v782 = vmul.f32 %v779, %v781
          %v783 = vadd.f32 %v782, 0.0036580483
          %v784 = vmul.f32 %v779, %v783
          %v785 = vadd.f32 %v784, 0.05243302
          %v786 = vmul.f32 %v779, %v785
          %v787 = vadd.f32 %v786, 0.18741608
          %v788 = vmul.f32 %v779, %v787
          %v789 = vadd.f32 %v788, 1.1283791
          %v790 = vmul.f32 %v497, %v789
          %v791 = vmul.f32 %v779, 3.8918573e-05
          %v792 = vadd.f32 %v791, 0.001143296
          %v793 = vmul.f32 %v779, %v792
          %v794 = vadd.f32 %v793, 0.014752088
          %v795 = vmul.f32 %v779, %v794
          %v796 = vadd.f32 %v795, 0.112945676
          %v797 = vmul.f32 %v779, %v796
          %v798 = vadd.f32 %v797, 0.4994258
          %v799 = vmul.f32 %v779, %v798
          %v800 = vadd.f32 %v799, 1.0
          %v801 = vrcp.pop %v800
          %v802 = vmul.f32 %v800, %v801
          %v803 = vsub.f32 1.0, %v802
          %v804 = vmul.f32 %v801, %v803
          %v805 = vadd.f32 %v801, %v804
          %vm806 = vweird.f32 %v800
          %vm807 = vweird.f32 %v801
          %vm808 = vmor %vm806, %vm807
          %v809 = vsel %vm808, %v801, %v805
          %v810 = vand.u32 2147483647, %v800
          %vm811 = vcmp.eq.f32.partialorder %v810, 8.507059e+37
          %v812 = vand.u32 %v800, 2147483648
          %v813 = vor.u32 1.1754944e-38, %v812
          %v814 = vsel %vm811, %v813, %v809
          %v815 = vmul.f32 %v790, %v814
          %v816 = vmin.f32 %v815, 1.0
          %v817 = vmax.f32 %v816, -1.0
          %v818 = vadd.f32 %v537, 1.0
          %v819 = vadd.f32 %v577, 1.0
          %v820 = vadd.f32 %v617, 1.0
          %v821 = vadd.f32 %v657, 1.0
          %v822 = vadd.f32 %v697, 1.0
          %v823 = vadd.f32 %v737, 1.0
          %v824 = vadd.f32 %v777, 1.0
          %v825 = vadd.f32 %v817, 1.0
          %v826 = vmul.f32 %v482, %v818
          %v827 = vmul.f32 %v483, %v819
          %v828 = vmul.f32 %v484, %v820
          %v829 = vmul.f32 %v485, %v821
          %v830 = vmul.f32 %v486, %v822
          %v831 = vmul.f32 %v487, %v823
          %v832 = vmul.f32 %v488, %v824
          %v833 = vmul.f32 %v489, %v825
          %834 = vst [vmem:[%s293] sm:$0xff] %v826
          %835 = vst [vmem:[%s293 + $0x8] sm:$0xff] %v827
          %836 = vst [vmem:[%s293 + $0x10] sm:$0xff] %v828
          %837 = vst [vmem:[%s293 + $0x18] sm:$0xff] %v829
          %838 = vst [vmem:[%s293 + $0x20] sm:$0xff] %v830
          %839 = vst [vmem:[%s293 + $0x28] sm:$0xff] %v831
          %840 = vst [vmem:[%s293 + $0x30] sm:$0xff] %v832
          %841 = vst [vmem:[%s293 + $0x38] sm:$0xff] %v833
        $region52: #{tpu_custom_call.1} parent=31 // pred_fallthru
          _
        %s842 = sand.u32 %s134, 1
        %s843 = scalar_lea.sflag [#allocation5], %s842
        %s844 = sand.u32 %s134, 1
        %s845 = smul.addr %s844, 64
        %s846 = scalar_lea.vmem [#allocation9], %s845
        // Predicated region
        $region53: #{tpu_custom_call.1} parent=31 // pred_check
          %p847 = pneg %p144
        $region54: #{tpu_custom_call.1} parent=31 // pred_check_branch
          %849 = sbr.rel (%p847) target = $region56
        $region55: #{tpu_custom_call.1} parent=31 // pred_region
          %s850 = smul.u32 8, %s28
          %852 = vsyncadd %s843, 0
          %s853 = smul.addr %s850, 3
          %s854 = sadd.s32 %s29, %s853
          %s855 = smul.addr %s854, 8
          %s856 = scalar_lea.hbm %s3, %s855
          %s857 = sshll.u32 %s846, 4
          %s858 = int_to_ptr.vmem [resolvable:$true] %s857
          %s859 = sshll.u32 %s856, 4
          %s860 = int_to_ptr.hbm [resolvable:$true] %s859
          %865 = dma.vmem_to_hbm [thread:$0]  %s858, 1024, %s860, %s843, 128, 384, 8
        $region56: #{tpu_custom_call.1} parent=31 // pred_fallthru
          _
      $region32: #{tpu_custom_call.1} parent=5 // pred_fallthru
        _
      %p866 = scmp.le.s32.totalorder 2, %s18
      // Predicated region
      $region57: #{tpu_custom_call.1} parent=5 // pred_check
        %p867 = pneg %p866
      $region58: #{tpu_custom_call.1} parent=5 // pred_check_branch
        %869 = sbr.rel (%p867) target = $region60
      $region59: #{tpu_custom_call.1} parent=5 // pred_region
        %s870 = ssub.s32 %s18, 2
        // Predicated region
        $region61: #{tpu_custom_call.1} parent=59 // pred_check
          %p871 = pneg %p150
        $region62: #{tpu_custom_call.1} parent=59 // pred_check_branch
          %873 = sbr.rel (%p871) target = $region64
        $region63: #{tpu_custom_call.1} parent=59 // pred_region
          %s874 = sand.u32 %s135, 1
          %s875 = scalar_lea.sflag [#allocation5], %s874
          %s876 = sand.u32 %s135, 1
          %s877 = smul.addr %s876, 64
          %s878 = scalar_lea.vmem [#allocation9], %s877
          %880 = dma.done %s875, 1024
        $region64: #{tpu_custom_call.1} parent=59 // pred_fallthru
          _
      $region60: #{tpu_custom_call.1} parent=5 // pred_fallthru
        _
    $region6: #{tpu_custom_call.1} parent=1 // loop_footer
      %s22 = sadd.s32 1, %s18
    $region7: #{tpu_custom_call.1} parent=1 // loop_footer_branch
      %17 = sbr.rel target = $region3
    $region8: #{tpu_custom_call.1} parent=1 // loop_exit
      _
    %881 = vsyncpa [#allocation4], 1
    %s882 = scalar_lea.sflag [#allocation4], 1
    %883 = vsyncpa %s882, 1
    %884 = vsyncpa [#allocation7], 1
    %s885 = scalar_lea.sflag [#allocation7], 1
    %886 = vsyncpa %s885, 1
    %887 = vsyncpa [#allocation5], 1
    %s888 = scalar_lea.sflag [#allocation5], 1
    %889 = vsyncpa %s888, 1

</llo_original>
